<compile_context>
chip_gen: v6e
topology: v6e:2x2x1
jax: 0.10.0
libtpu: 0.0.40
codegen_flags: <defaults>
</compile_context>

<pallas_src>
import functools
import math

import numpy as np

import jax
import jax.numpy as jnp
from jax.experimental import pallas as pl
from jax.experimental.pallas import tpu as pltpu


def _tsm_kernel(t_pos_ref, x_ref, o_ref, *, fold, seg_len):
    """One lane-dense (block_rows, C) tile per grid step.

    The flattened row axis is (n_batch * n_segment * seg_len); every block
    starts on a segment boundary (block_rows % seg_len == 0), so t_pos_ref
    holds the within-segment temporal index of every row of the block.

      channels [0, fold)      : out[t] = x[t+1]   (last row of a segment -> 0)
      channels [fold, 2*fold) : out[t] = x[t-1]   (first row of a segment -> 0)
      channels [2*fold, C)    : passthrough
    """
    x = x_ref[...]                                       # (BR, C)
    br, c = x.shape
    zeros = jnp.zeros_like(x)

    # Channel predicate: lane iota (generated per-vreg, cheap).
    c_idx = jax.lax.broadcasted_iota(jnp.int32, (br, c), 1)

    if seg_len > 1:
        # Within-segment temporal position of every row, lane-broadcast (i32).
        t_idx = jnp.broadcast_to(t_pos_ref[...], (br, c))
        # Circular +/-1 sublane rolls (XLU slot).  The wrapped rows are exactly
        # the segment-boundary rows, which get zeroed below, so wraparound
        # across segments / blocks never reaches the output.
        left = pltpu.roll(x, br - 1, 0)                  # out[t] = x[t+1]
        right = pltpu.roll(x, 1, 0)                      # out[t] = x[t-1]
        left = jnp.where(t_idx == seg_len - 1, zeros, left)
        right = jnp.where(t_idx == 0, zeros, right)
    else:
        # seg_len == 1: both shifted channel groups are entirely zero.
        left = zeros
        right = zeros

    o_ref[...] = jnp.where(c_idx < fold, left,
                           jnp.where(c_idx < 2 * fold, right, x))


def _choose_block_rows(total_rows, seg_len, c_dim, itemsize,
                       vmem_budget_bytes=8 * 1024 * 1024):
    """Rows per block: whole segments, 8-sublane aligned, ~vmem_budget total.

    Budget counts double-buffered in + out tiles plus the (rows, 1) position
    column (lane-padded to 128), so it stays inside the conservative 16 MiB
    default scoped-VMEM limit of v5e without raising vmem_limit_bytes.
    """
    unit = seg_len * 8 // math.gcd(seg_len, 8)           # lcm(seg_len, 8)
    lane_bytes = (-(-c_dim // 128)) * 128 * max(int(itemsize), 1)
    aux_bytes = 128 * 4                                  # (rows, 1) i32, lane-padded
    per_row = 2 * (2 * lane_bytes + aux_bytes)           # double-buffered in + out
    rows = max(unit, (vmem_budget_bytes // per_row) // unit * unit)
    if rows >= total_rows:
        return total_rows                                # single / full block
    return int(rows)


def temporal_shift(x, n_segment=8, n_div=8):
    """JAX/Pallas equivalent of TemporalShift.forward for 3-D (N, T, C) input."""
    n_batch, t_dim, c_dim = x.shape
    original_t = t_dim

    padded = False
    if t_dim % n_segment != 0:
        # TODO(synk): fuse this zero-pad + final slice into the kernel; as-is it
        # costs one extra HBM round trip whenever T % n_segment != 0.
        pad = n_segment - t_dim % n_segment
        x = jnp.pad(x, ((0, 0), (0, pad), (0, 0)))
        t_dim = x.shape[1]
        padded = True

    seg_len = t_dim // n_segment
    fold = c_dim // n_div

    # Same row-major data as torch's view(N * n_segment, seg_len, C), flattened
    # to a lane-dense 2-D (rows, C) slab: row r <-> (segment r // seg_len,
    # within-segment time r % seg_len).
    total_rows = n_batch * t_dim
    x2 = x.reshape(total_rows, c_dim)

    block_rows = _choose_block_rows(total_rows, seg_len, c_dim,
                                    x2.dtype.itemsize)
    grid = (pl.cdiv(total_rows, block_rows),)

    # Per-block within-segment position column (identical for every block,
    # since every block starts on a segment boundary).
    t_pos = np.tile(np.arange(seg_len, dtype=np.int32),
                    block_rows // seg_len)[:, None]      # (block_rows, 1)

    kernel = functools.partial(_tsm_kernel, fold=fold, seg_len=seg_len)
    out = pl.pallas_call(
        kernel,
        out_shape=jax.ShapeDtypeStruct((total_rows, c_dim), x2.dtype),
        grid=grid,
        in_specs=[
            pl.BlockSpec((block_rows, 1), lambda i: (0, 0)),        # t_pos
            pl.BlockSpec((block_rows, c_dim), lambda i: (i, 0)),    # x
        ],
        out_specs=pl.BlockSpec((block_rows, c_dim), lambda i: (i, 0)),
        compiler_params=pltpu.CompilerParams(
            dimension_semantics=("parallel",)),
    )(t_pos, x2)

    out = out.reshape(n_batch, t_dim, c_dim)
    if padded:
        out = out[:, :original_t, :]
    return out


def _temporal_shift_ref(x, n_segment=8, n_div=8):
    """Pure-JAX reference mirroring the PyTorch (non-inplace) code path."""
    n_batch, t_dim, c_dim = x.shape
    original_t = t_dim
    padded = False
    if t_dim % n_segment != 0:
        pad = n_segment - t_dim % n_segment
        x = jnp.concatenate([x, jnp.zeros((n_batch, pad, c_dim), x.dtype)], axis=1)
        t_dim = x.shape[1]
        padded = True
    xr = x.reshape(n_batch * n_segment, t_dim // n_segment, c_dim)
    fold = c_dim // n_div
    out = jnp.zeros_like(xr)
    out = out.at[:, :-1, :fold].set(xr[:, 1:, :fold])
    out = out.at[:, 1:, fold:2 * fold].set(xr[:, :-1, fold:2 * fold])
    out = out.at[:, :, 2 * fold:].set(xr[:, :, 2 * fold:])
    out = out.reshape(n_batch, t_dim, c_dim)
    if padded:
        out = out[:, :original_t, :]
    return out


if __name__ == "__main__":
    key = jax.random.PRNGKey(0)
    k1, k2 = jax.random.split(key)

    # Aligned case: T % n_segment == 0 (no wrapper pad; seg_len = 2).
    xa = jax.random.normal(k1, (2, 16, 32), dtype=jnp.float32)
    ya = jax.block_until_ready(temporal_shift(xa, n_segment=8, n_div=8))
    ya_ref = _temporal_shift_ref(xa, n_segment=8, n_div=8)
    assert ya.shape == xa.shape
    assert jnp.allclose(ya, ya_ref, atol=1e-6, rtol=1e-6)

    # Ragged case: T % n_segment != 0 exercises the pad + final-slice path.
    xb = jax.random.normal(k2, (2, 12, 32), dtype=jnp.float32)
    yb = jax.block_until_ready(temporal_shift(xb, n_segment=8, n_div=8))
    yb_ref = _temporal_shift_ref(xb, n_segment=8, n_div=8)
    assert yb.shape == xb.shape
    assert jnp.allclose(yb, yb_ref, atol=1e-6, rtol=1e-6)

    print("KERNEL_OK")
</pallas_src>

<mosaic_0001>
module attributes {stable_mosaic.version = 11 : i64} {
  func.func @_tsm_kernel(%arg0: i32, %arg1: memref<32x1xi32, #tpu.memory_space<vmem>>, %arg2: memref<32x32xf32, #tpu.memory_space<vmem>>, %arg3: memref<32x32xf32, #tpu.memory_space<vmem>>) attributes {dimension_semantics = [#tpu.dimension_semantics<parallel>], iteration_bounds = array<i64: 1>, scalar_prefetch = 0 : i64, scratch_operands = 0 : i64, tpu.core_type = #tpu.core_type<tc>, window_params = [{pipeline_mode = #tpu.pipeline_mode<synchronous>, transform_indices = @transform_0, window_bounds = array<i64: 32, 1>}, {transform_indices = @transform_1, window_bounds = array<i64: 32, 32>}, {transform_indices = @transform_2, window_bounds = array<i64: 32, 32>}]} {
    %c0 = arith.constant 0 : index
    %c0_0 = arith.constant 0 : index
    %0 = vector.load %arg2[%c0, %c0_0] : memref<32x32xf32, #tpu.memory_space<vmem>>, vector<32x32xf32>
    %cst = arith.constant 0.000000e+00 : f32
    %1 = vector.broadcast %cst : f32 to vector<32x32xf32>
    %2 = tpu.iota {dimensions = array<i32: 1>} : vector<32x32xi32>
    %c0_1 = arith.constant 0 : index
    %c0_2 = arith.constant 0 : index
    %3 = vector.load %arg1[%c0_1, %c0_2] : memref<32x1xi32, #tpu.memory_space<vmem>>, vector<32x1xi32>
    %4 = vector.shape_cast %3 : vector<32x1xi32> to vector<32x1xi32>
    %5 = vector.broadcast %4 : vector<32x1xi32> to vector<32x32xi32>
    %c31_i32 = arith.constant 31 : i32
    %6 = tpu.dynamic_rotate %0 by %c31_i32 dim 0 : vector<32x32xf32>, i32 -> vector<32x32xf32>
    %c1_i32 = arith.constant 1 : i32
    %7 = tpu.dynamic_rotate %0 by %c1_i32 dim 0 : vector<32x32xf32>, i32 -> vector<32x32xf32>
    %c1_i32_3 = arith.constant 1 : i32
    %8 = vector.broadcast %c1_i32_3 : i32 to vector<32x32xi32>
    %9 = arith.cmpi eq, %5, %8 : vector<32x32xi32>
    %10 = arith.select %9, %1, %6 : vector<32x32xi1>, vector<32x32xf32>
    %c0_i32 = arith.constant 0 : i32
    %11 = vector.broadcast %c0_i32 : i32 to vector<32x32xi32>
    %12 = arith.cmpi eq, %5, %11 : vector<32x32xi32>
    %13 = arith.select %12, %1, %7 : vector<32x32xi1>, vector<32x32xf32>
    %c4_i32 = arith.constant 4 : i32
    %14 = vector.broadcast %c4_i32 : i32 to vector<32x32xi32>
    %15 = arith.cmpi slt, %2, %14 : vector<32x32xi32>
    %c8_i32 = arith.constant 8 : i32
    %16 = vector.broadcast %c8_i32 : i32 to vector<32x32xi32>
    %17 = arith.cmpi slt, %2, %16 : vector<32x32xi32>
    %18 = arith.select %17, %13, %0 : vector<32x32xi1>, vector<32x32xf32>
    %19 = arith.select %15, %10, %18 : vector<32x32xi1>, vector<32x32xf32>
    %c0_4 = arith.constant 0 : index
    %c0_5 = arith.constant 0 : index
    %20 = vector.load %arg3[%c0_4, %c0_5] : memref<32x32xf32, #tpu.memory_space<vmem>>, vector<32x32xf32>
    tpu.vector_store %arg3[%c0_4, %c0_5], %19 {strides = array<i32>} : memref<32x32xf32, #tpu.memory_space<vmem>>, vector<32x32xf32>,
    return
  }
  func.func @transform_0(%arg0: i32) -> (i32, i32) {
    %c0_i32 = arith.constant 0 : i32
    %c0_i32_0 = arith.constant 0 : i32
    %c0_i32_1 = arith.constant 0 : i32
    return %c0_i32, %c0_i32_0 : i32, i32
  }
  func.func @transform_1(%arg0: i32) -> (i32, i32) {
    %c0_i32 = arith.constant 0 : i32
    %c0_i32_0 = arith.constant 0 : i32
    return %arg0, %c0_i32 : i32, i32
  }
  func.func @transform_2(%arg0: i32) -> (i32, i32) {
    %c0_i32 = arith.constant 0 : i32
    %c0_i32_0 = arith.constant 0 : i32
    return %arg0, %c0_i32 : i32, i32
  }
}

</mosaic_0001>

<llo_original>
// kernel: tpu_custom_call.1
$region0: #{tpu_custom_call.1}
  #allocation0 [shape = 'u32[]', space=smem, size = 0x4, offset = 0x4, fixed_abs, tag = 'smem constant byte address 0x4 - core index']
  #allocation1 [shape = 'u32[144,128]{1,0:T(1,128)}', space=vmem, size = 0x12000, scoped, tag = 'internal scratch']
  %s0 = inlined_call_operand.vmem [shape: s32[32,1], index: 0, kind: input, shape index: {}]
  %s1 = inlined_call_operand.vmem [shape: f32[32,32], index: 1, kind: input, shape index: {}]
  %s2 = inlined_call_operand.hbm [shape: f32[32,32], index: 2, kind: output, shape index: {}]
  %s3 = sld [smem:[#allocation0]]
  $region18: #{tpu_custom_call.1} parent=0
    _
  %s5 = ssub.s32 1, %s3
  %s6 = scalar_select 0, %s5, %s3
  $region1: #{tpu_custom_call.1} parent=0
    #allocation2 [shape = 'u8[16384]{0}', space=vmem, size = 0x4000, scoped, tag = 'output window, operand 0, single buffered']
    #allocation3 [shape = 's32[1]{0}', space=sflag, size = 0x4, scoped, tag = 'scoped memory for tpu_custom_call.1']
    %7 = vsyncpa [#allocation3], 0
    // Predicated region
    $region2: #{tpu_custom_call.1} parent=1 // pred_check
      _
    $region3: #{tpu_custom_call.1} parent=1 // pred_check_branch
      %9 = sbr.rel (0) target = $region5
    $region4: #{tpu_custom_call.1} parent=1 // pred_region
      _
    $region5: #{tpu_custom_call.1} parent=1 // pred_fallthru
      _
    // Predicated region
    $region6: #{tpu_custom_call.1} parent=1 // pred_check
      _
    $region7: #{tpu_custom_call.1} parent=1 // pred_check_branch
      %11 = sbr.rel (0) target = $region9
    $region8: #{tpu_custom_call.1} parent=1 // pred_region
      _
    $region9: #{tpu_custom_call.1} parent=1 // pred_fallthru
      _
    %v12 = vld [vmem:[%s1] sm:$0xff]
    %v13 = vld [vmem:[%s1 + $0x8] sm:$0xff]
    %v14 = vld [vmem:[%s1 + $0x10] sm:$0xff]
    %v15 = vld [vmem:[%s1 + $0x18] sm:$0xff]
    %v16 = vlaneseq
    %v17 = vand.u32 %v16, 127
    %v18 = vld [vmem:[%s0] sm:$0xff]
    %v19 = vld [vmem:[%s0 + $0x8] sm:$0xff]
    %v20 = vld [vmem:[%s0 + $0x10] sm:$0xff]
    %v21 = vld [vmem:[%s0 + $0x18] sm:$0xff]
    %22 = vset.pattern.permute.xlu0 0
    %23 = vperm.xlu0 %22, %v18
    %v24 = vpop.permute.xlu0 %23
    %25 = vset.pattern.permute.xlu0 0
    %26 = vperm.xlu0 %25, %v19
    %v27 = vpop.permute.xlu0 %26
    %28 = vset.pattern.permute.xlu0 0
    %29 = vperm.xlu0 %28, %v20
    %v30 = vpop.permute.xlu0 %29
    %31 = vset.pattern.permute.xlu0 0
    %32 = vperm.xlu0 %31, %v21
    %v33 = vpop.permute.xlu0 %32
    %v34 = vrot.slane %v12, 1
    %v35 = vrot.slane %v13, 1
    %v36 = vrot.slane %v14, 1
    %v37 = vrot.slane %v15, 1
    %v38 = vlaneseq
    %v39 = vshrl.u32 %v38, 7
    %vm40 = vcmp.lt.s32.totalorder %v39, 7
    %v41 = vsel %vm40, %v36, %v37
    %v42 = vsel %vm40, %v35, %v36
    %v43 = vsel %vm40, %v34, %v35
    %v44 = vsel %vm40, %v37, %v34
    %v45 = vrot.slane %v12, 7
    %v46 = vrot.slane %v13, 7
    %v47 = vrot.slane %v14, 7
    %v48 = vrot.slane %v15, 7
    %vm49 = vcmp.lt.s32.totalorder %v39, 1
    %v50 = vsel %vm49, %v47, %v48
    %v51 = vsel %vm49, %v46, %v47
    %v52 = vsel %vm49, %v45, %v46
    %v53 = vsel %vm49, %v48, %v45
    %vm54 = vcmp.eq.s32.totalorder %v24, 1
    %vm55 = vcmp.eq.s32.totalorder %v27, 1
    %vm56 = vcmp.eq.s32.totalorder %v30, 1
    %vm57 = vcmp.eq.s32.totalorder %v33, 1
    %v58 = vsel %vm54, 0.0, %v43
    %v59 = vsel %vm55, 0.0, %v42
    %v60 = vsel %vm56, 0.0, %v41
    %v61 = vsel %vm57, 0.0, %v44
    %vm62 = vcmp.eq.s32.totalorder %v24, 0
    %vm63 = vcmp.eq.s32.totalorder %v27, 0
    %vm64 = vcmp.eq.s32.totalorder %v30, 0
    %vm65 = vcmp.eq.s32.totalorder %v33, 0
    %v66 = vsel %vm62, 0.0, %v53
    %v67 = vsel %vm63, 0.0, %v52
    %v68 = vsel %vm64, 0.0, %v51
    %v69 = vsel %vm65, 0.0, %v50
    %vm70 = vcmp.lt.s32.totalorder %v17, 4
    %vm71 = vcmp.lt.s32.totalorder %v17, 8
    %v72 = vsel %vm71, %v66, %v12
    %v73 = vsel %vm71, %v67, %v13
    %v74 = vsel %vm71, %v68, %v14
    %v75 = vsel %vm71, %v69, %v15
    %v76 = vsel %vm70, %v58, %v72
    %v77 = vsel %vm70, %v59, %v73
    %v78 = vsel %vm70, %v60, %v74
    %v79 = vsel %vm70, %v61, %v75
    %vm80 = vcmask 261120
    %81 = vst.msk [vmem:[#allocation2] sm:$0xff] %vm80, %v76
    %82 = vst.msk [vmem:[#allocation2 + $0x8] sm:$0xff] %vm80, %v77
    %83 = vst.msk [vmem:[#allocation2 + $0x10] sm:$0xff] %vm80, %v78
    %84 = vst.msk [vmem:[#allocation2 + $0x18] sm:$0xff] %vm80, %v79
    // Predicated region
    $region10: #{tpu_custom_call.1} parent=1 // pred_check
      _
    $region11: #{tpu_custom_call.1} parent=1 // pred_check_branch
      %86 = sbr.rel (0) target = $region13
    $region12: #{tpu_custom_call.1} parent=1 // pred_region
      %s88 = ssub.s32 512, 512
      %89 = vsyncadd [#allocation3], %s88
      %s90 = sshll.u32 [#allocation2], 4
      %s91 = int_to_ptr.vmem [resolvable:$true] %s90
      %96 = dma.vmem_to_hbm [thread:$0]  %s91, 512, %s2, [#allocation3], 128, 128, 8
    $region13: #{tpu_custom_call.1} parent=1 // pred_fallthru
      _
    // Predicated region
    $region14: #{tpu_custom_call.1} parent=1 // pred_check
      _
    $region15: #{tpu_custom_call.1} parent=1 // pred_check_branch
      %98 = sbr.rel (0) target = $region17
    $region16: #{tpu_custom_call.1} parent=1 // pred_region
      %99 = dma.done [#allocation3], 512
    $region17: #{tpu_custom_call.1} parent=1 // pred_fallthru
      _
    %100 = vsyncpa [#allocation3], 1

</llo_original>
